<compile_context>
chip_gen: v7x
topology: tpu7x:2x2x1
jax: 0.10.0
libtpu: 0.0.40
codegen_flags: <defaults>
</compile_context>

<pallas_src>
import jax
import jax.numpy as jnp
from jax import lax
from jax.experimental import pallas as pl
from jax.experimental.pallas import tpu as pltpu

B = 2          # batch
C_IN = 3       # in_channel (xyz points)
C_OUT = 32     # embedding_channel == 32 -> Conv1d has no bias
N = 256        # number of points (lane-dense: 2 x 128)
EPS = 1e-5
NEG_SLOPE = 0.01


def fused_embedding_kernel(x_ref, p_ref, o_ref):
    """1x1 conv (VPU FMAs) + training-mode BN + LeakyReLU, single shot.

    x_ref: (B, C_IN, N)        input points, untouched layout from the caller.
    p_ref: (C_OUT, C_IN + 2)   packed [conv weight | gamma | beta].
    o_ref: (B, C_OUT, N)       output, written per batch (lane-dense vst).
    """
    Bb, Ci, Nn = x_ref.shape
    Co = p_ref.shape[0]

    x = x_ref[...]                      # (B, C_IN, N)   ~6 KiB
    p = p_ref[...]                      # (C_OUT, C_IN+2)
    w = p[:, :Ci]                       # (C_OUT, C_IN)
    gamma = p[:, Ci:Ci + 1]             # (C_OUT, 1)
    beta = p[:, Ci + 1:Ci + 2]          # (C_OUT, 1)

    inv_count = 1.0 / float(Bb * Nn)

    # --- 1x1 conv: C_IN broadcast-FMAs per batch (static unroll, VPU) ---------
    ys = []
    total = jnp.zeros((Co, 1), jnp.float32)
    for b in range(Bb):
        y = w[:, 0:1] * x[b, 0:1, :]                     # (C_OUT, N)
        for c in range(1, Ci):
            y = y + w[:, c:c + 1] * x[b, c:c + 1, :]
        ys.append(y)
        total = total + jnp.sum(y, axis=1, keepdims=True)

    # --- BatchNorm1d training statistics (two-pass / centered variance) -------
    mean = total * inv_count                             # (C_OUT, 1)
    ssq = jnp.zeros((Co, 1), jnp.float32)
    for b in range(Bb):
        d = ys[b] - mean
        ssq = ssq + jnp.sum(d * d, axis=1, keepdims=True)
    var = ssq * inv_count                                # biased variance

    inv_std = lax.rsqrt(var + EPS)                       # EUP rsqrt (free slot)
    scale = gamma * inv_std                              # (C_OUT, 1)
    shift = beta - mean * scale                          # (C_OUT, 1)

    # --- normalize + LeakyReLU, per-batch lane-dense stores --------------------
    for b in range(Bb):
        z = ys[b] * scale + shift                        # (C_OUT, N)
        o_ref[b, :, :] = jnp.maximum(z, NEG_SLOPE * z)   # single vmax leaky relu


def pack_params(w, gamma, beta):
    """Pack conv weight + BN affine params into one (C_OUT, C_IN+2) block.

    Done once outside the hot path (parameters are static per forward).
    """
    return jnp.concatenate(
        [w.astype(jnp.float32),
         gamma.astype(jnp.float32)[:, None],
         beta.astype(jnp.float32)[:, None]],
        axis=1,
    )


def embedding_layer_forward(x, params):
    """x: (B, C_IN, N) f32; params: (C_OUT, C_IN+2) f32 -> (B, C_OUT, N) f32."""
    Bb, _, Nn = x.shape
    Co = params.shape[0]
    return pl.pallas_call(
        fused_embedding_kernel,
        out_shape=jax.ShapeDtypeStruct((Bb, Co, Nn), jnp.float32),
        in_specs=[
            pl.BlockSpec(memory_space=pltpu.MemorySpace.VMEM),   # x      (2, 3, 256)
            pl.BlockSpec(memory_space=pltpu.MemorySpace.VMEM),   # params (32, 5)
        ],
        out_specs=pl.BlockSpec(memory_space=pltpu.MemorySpace.VMEM),
    )(x, params)


def reference(x, w, gamma, beta):
    """Pure-JAX reference of the torch forward (training-mode BN)."""
    y = jnp.einsum('oc,bcn->bon', w, x)
    mean = y.mean(axis=(0, 2), keepdims=True)
    var = ((y - mean) ** 2).mean(axis=(0, 2), keepdims=True)
    yn = (y - mean) / jnp.sqrt(var + EPS)
    yn = yn * gamma[None, :, None] + beta[None, :, None]
    return jnp.where(yn > 0, yn, NEG_SLOPE * yn)


if __name__ == "__main__":
    key = jax.random.PRNGKey(0)
    kx, kw, kg, kb = jax.random.split(key, 4)

    x = jax.random.normal(kx, (B, C_IN, N), dtype=jnp.float32)
    # Conv1d weight: torch shape (C_OUT, C_IN, 1) -> squeeze kernel dim -> (C_OUT, C_IN)
    w = jax.random.normal(kw, (C_OUT, C_IN), dtype=jnp.float32) / jnp.sqrt(float(C_IN))
    gamma = 1.0 + 0.1 * jax.random.normal(kg, (C_OUT,), dtype=jnp.float32)
    beta = 0.1 * jax.random.normal(kb, (C_OUT,), dtype=jnp.float32)

    params = pack_params(w, gamma, beta)       # packed once, outside the hot path

    out = embedding_layer_forward(x, params)
    out = jax.block_until_ready(out)

    ref = reference(x, w, gamma, beta)
    assert out.shape == (B, C_OUT, N)
    err = float(jnp.max(jnp.abs(out - ref)))
    assert jnp.allclose(out, ref, atol=2e-4, rtol=2e-4), err
    print("KERNEL_OK")
</pallas_src>

<mosaic_0001>
module attributes {stable_mosaic.version = 11 : i64} {
  func.func @fused_embedding_kernel(%arg0: memref<2x3x256xf32, #tpu.memory_space<vmem>>, %arg1: memref<32x5xf32, #tpu.memory_space<vmem>>, %arg2: memref<2x32x256xf32, #tpu.memory_space<vmem>>) attributes {dimension_semantics = [], scalar_prefetch = 0 : i64, scratch_operands = 0 : i64, tpu.core_type = #tpu.core_type<tc>} {
    %c0 = arith.constant 0 : index
    %c0_0 = arith.constant 0 : index
    %c0_1 = arith.constant 0 : index
    %0 = vector.load %arg0[%c0, %c0_0, %c0_1] : memref<2x3x256xf32, #tpu.memory_space<vmem>>, vector<2x3x256xf32>
    %c0_2 = arith.constant 0 : index
    %c0_3 = arith.constant 0 : index
    %1 = vector.load %arg1[%c0_2, %c0_3] : memref<32x5xf32, #tpu.memory_space<vmem>>, vector<32x5xf32>
    %2 = vector.extract_strided_slice %1 {offsets = [0, 0], sizes = [32, 3], strides = [1, 1]} : vector<32x5xf32> to vector<32x3xf32>
    %3 = vector.extract_strided_slice %1 {offsets = [0, 3], sizes = [32, 1], strides = [1, 1]} : vector<32x5xf32> to vector<32x1xf32>
    %4 = vector.extract_strided_slice %1 {offsets = [0, 4], sizes = [32, 1], strides = [1, 1]} : vector<32x5xf32> to vector<32x1xf32>
    %cst = arith.constant 0.000000e+00 : f32
    %5 = vector.broadcast %cst : f32 to vector<32x1xf32>
    %6 = vector.extract_strided_slice %2 {offsets = [0, 0], sizes = [32, 1], strides = [1, 1]} : vector<32x3xf32> to vector<32x1xf32>
    %7 = vector.extract_strided_slice %0 {offsets = [0, 0, 0], sizes = [1, 1, 256], strides = [1, 1, 1]} : vector<2x3x256xf32> to vector<1x1x256xf32>
    %8 = vector.shape_cast %7 : vector<1x1x256xf32> to vector<1x256xf32>
    %9 = vector.broadcast %6 : vector<32x1xf32> to vector<32x256xf32>
    %10 = vector.broadcast %8 : vector<1x256xf32> to vector<32x256xf32>
    %11 = arith.mulf %9, %10 : vector<32x256xf32>
    %12 = vector.extract_strided_slice %2 {offsets = [0, 1], sizes = [32, 1], strides = [1, 1]} : vector<32x3xf32> to vector<32x1xf32>
    %13 = vector.extract_strided_slice %0 {offsets = [0, 1, 0], sizes = [1, 1, 256], strides = [1, 1, 1]} : vector<2x3x256xf32> to vector<1x1x256xf32>
    %14 = vector.shape_cast %13 : vector<1x1x256xf32> to vector<1x256xf32>
    %15 = vector.broadcast %12 : vector<32x1xf32> to vector<32x256xf32>
    %16 = vector.broadcast %14 : vector<1x256xf32> to vector<32x256xf32>
    %17 = arith.mulf %15, %16 : vector<32x256xf32>
    %18 = arith.addf %11, %17 : vector<32x256xf32>
    %19 = vector.extract_strided_slice %2 {offsets = [0, 2], sizes = [32, 1], strides = [1, 1]} : vector<32x3xf32> to vector<32x1xf32>
    %20 = vector.extract_strided_slice %0 {offsets = [0, 2, 0], sizes = [1, 1, 256], strides = [1, 1, 1]} : vector<2x3x256xf32> to vector<1x1x256xf32>
    %21 = vector.shape_cast %20 : vector<1x1x256xf32> to vector<1x256xf32>
    %22 = vector.broadcast %19 : vector<32x1xf32> to vector<32x256xf32>
    %23 = vector.broadcast %21 : vector<1x256xf32> to vector<32x256xf32>
    %24 = arith.mulf %22, %23 : vector<32x256xf32>
    %25 = arith.addf %18, %24 : vector<32x256xf32>
    %cst_4 = arith.constant dense<0.000000e+00> : vector<32xf32>
    %26 = vector.multi_reduction <add>, %25, %cst_4 [1] : vector<32x256xf32> to vector<32xf32>
    %27 = vector.shape_cast %26 : vector<32xf32> to vector<32x1xf32>
    %28 = arith.addf %5, %27 : vector<32x1xf32>
    %29 = vector.extract_strided_slice %2 {offsets = [0, 0], sizes = [32, 1], strides = [1, 1]} : vector<32x3xf32> to vector<32x1xf32>
    %30 = vector.extract_strided_slice %0 {offsets = [1, 0, 0], sizes = [1, 1, 256], strides = [1, 1, 1]} : vector<2x3x256xf32> to vector<1x1x256xf32>
    %31 = vector.shape_cast %30 : vector<1x1x256xf32> to vector<1x256xf32>
    %32 = vector.broadcast %29 : vector<32x1xf32> to vector<32x256xf32>
    %33 = vector.broadcast %31 : vector<1x256xf32> to vector<32x256xf32>
    %34 = arith.mulf %32, %33 : vector<32x256xf32>
    %35 = vector.extract_strided_slice %2 {offsets = [0, 1], sizes = [32, 1], strides = [1, 1]} : vector<32x3xf32> to vector<32x1xf32>
    %36 = vector.extract_strided_slice %0 {offsets = [1, 1, 0], sizes = [1, 1, 256], strides = [1, 1, 1]} : vector<2x3x256xf32> to vector<1x1x256xf32>
    %37 = vector.shape_cast %36 : vector<1x1x256xf32> to vector<1x256xf32>
    %38 = vector.broadcast %35 : vector<32x1xf32> to vector<32x256xf32>
    %39 = vector.broadcast %37 : vector<1x256xf32> to vector<32x256xf32>
    %40 = arith.mulf %38, %39 : vector<32x256xf32>
    %41 = arith.addf %34, %40 : vector<32x256xf32>
    %42 = vector.extract_strided_slice %2 {offsets = [0, 2], sizes = [32, 1], strides = [1, 1]} : vector<32x3xf32> to vector<32x1xf32>
    %43 = vector.extract_strided_slice %0 {offsets = [1, 2, 0], sizes = [1, 1, 256], strides = [1, 1, 1]} : vector<2x3x256xf32> to vector<1x1x256xf32>
    %44 = vector.shape_cast %43 : vector<1x1x256xf32> to vector<1x256xf32>
    %45 = vector.broadcast %42 : vector<32x1xf32> to vector<32x256xf32>
    %46 = vector.broadcast %44 : vector<1x256xf32> to vector<32x256xf32>
    %47 = arith.mulf %45, %46 : vector<32x256xf32>
    %48 = arith.addf %41, %47 : vector<32x256xf32>
    %cst_5 = arith.constant dense<0.000000e+00> : vector<32xf32>
    %49 = vector.multi_reduction <add>, %48, %cst_5 [1] : vector<32x256xf32> to vector<32xf32>
    %50 = vector.shape_cast %49 : vector<32xf32> to vector<32x1xf32>
    %51 = arith.addf %28, %50 : vector<32x1xf32>
    %cst_6 = arith.constant 0.001953125 : f32
    %52 = vector.broadcast %cst_6 : f32 to vector<32x1xf32>
    %53 = arith.mulf %51, %52 : vector<32x1xf32>
    %cst_7 = arith.constant 0.000000e+00 : f32
    %54 = vector.broadcast %cst_7 : f32 to vector<32x1xf32>
    %55 = vector.broadcast %53 : vector<32x1xf32> to vector<32x256xf32>
    %56 = arith.subf %25, %55 : vector<32x256xf32>
    %57 = arith.mulf %56, %56 : vector<32x256xf32>
    %cst_8 = arith.constant dense<0.000000e+00> : vector<32xf32>
    %58 = vector.multi_reduction <add>, %57, %cst_8 [1] : vector<32x256xf32> to vector<32xf32>
    %59 = vector.shape_cast %58 : vector<32xf32> to vector<32x1xf32>
    %60 = arith.addf %54, %59 : vector<32x1xf32>
    %61 = vector.broadcast %53 : vector<32x1xf32> to vector<32x256xf32>
    %62 = arith.subf %48, %61 : vector<32x256xf32>
    %63 = arith.mulf %62, %62 : vector<32x256xf32>
    %cst_9 = arith.constant dense<0.000000e+00> : vector<32xf32>
    %64 = vector.multi_reduction <add>, %63, %cst_9 [1] : vector<32x256xf32> to vector<32xf32>
    %65 = vector.shape_cast %64 : vector<32xf32> to vector<32x1xf32>
    %66 = arith.addf %60, %65 : vector<32x1xf32>
    %cst_10 = arith.constant 0.001953125 : f32
    %67 = vector.broadcast %cst_10 : f32 to vector<32x1xf32>
    %68 = arith.mulf %66, %67 : vector<32x1xf32>
    %cst_11 = arith.constant 9.99999974E-6 : f32
    %69 = vector.broadcast %cst_11 : f32 to vector<32x1xf32>
    %70 = arith.addf %68, %69 : vector<32x1xf32>
    %71 = math.rsqrt %70 : vector<32x1xf32>
    %72 = arith.mulf %3, %71 : vector<32x1xf32>
    %73 = arith.mulf %53, %72 : vector<32x1xf32>
    %74 = arith.subf %4, %73 : vector<32x1xf32>
    %75 = vector.broadcast %72 : vector<32x1xf32> to vector<32x256xf32>
    %76 = arith.mulf %25, %75 : vector<32x256xf32>
    %77 = vector.broadcast %74 : vector<32x1xf32> to vector<32x256xf32>
    %78 = arith.addf %76, %77 : vector<32x256xf32>
    %cst_12 = arith.constant 0.00999999977 : f32
    %79 = vector.broadcast %cst_12 : f32 to vector<32x256xf32>
    %80 = arith.mulf %79, %78 : vector<32x256xf32>
    %81 = arith.maximumf %78, %80 : vector<32x256xf32>
    %c0_13 = arith.constant 0 : index
    %c0_14 = arith.constant 0 : index
    %c0_15 = arith.constant 0 : index
    %82 = vector.load %arg2[%c0_13, %c0_14, %c0_15] : memref<2x32x256xf32, #tpu.memory_space<vmem>>, vector<1x32x256xf32>
    %83 = vector.shape_cast %82 : vector<1x32x256xf32> to vector<32x256xf32>
    %84 = vector.shape_cast %81 : vector<32x256xf32> to vector<1x32x256xf32>
    tpu.vector_store %arg2[%c0_13, %c0_14, %c0_15], %84 {strides = array<i32>} : memref<2x32x256xf32, #tpu.memory_space<vmem>>, vector<1x32x256xf32>,
    %85 = vector.broadcast %72 : vector<32x1xf32> to vector<32x256xf32>
    %86 = arith.mulf %48, %85 : vector<32x256xf32>
    %87 = vector.broadcast %74 : vector<32x1xf32> to vector<32x256xf32>
    %88 = arith.addf %86, %87 : vector<32x256xf32>
    %cst_16 = arith.constant 0.00999999977 : f32
    %89 = vector.broadcast %cst_16 : f32 to vector<32x256xf32>
    %90 = arith.mulf %89, %88 : vector<32x256xf32>
    %91 = arith.maximumf %88, %90 : vector<32x256xf32>
    %c1 = arith.constant 1 : index
    %c0_17 = arith.constant 0 : index
    %c0_18 = arith.constant 0 : index
    %92 = vector.load %arg2[%c1, %c0_17, %c0_18] : memref<2x32x256xf32, #tpu.memory_space<vmem>>, vector<1x32x256xf32>
    %93 = vector.shape_cast %92 : vector<1x32x256xf32> to vector<32x256xf32>
    %94 = vector.shape_cast %91 : vector<32x256xf32> to vector<1x32x256xf32>
    tpu.vector_store %arg2[%c1, %c0_17, %c0_18], %94 {strides = array<i32>} : memref<2x32x256xf32, #tpu.memory_space<vmem>>, vector<1x32x256xf32>,
    return
  }
}

</mosaic_0001>

<llo_original>
// kernel: tpu_custom_call.1
$region0: #{tpu_custom_call.1}
  #allocation0 [shape = 'u32[]', space=smem, size = 0x4, offset = 0x4, fixed_abs, tag = 'smem constant byte address 0x4 - core index']
  #allocation1 [shape = 'u32[144,128]{1,0:T(1,128)}', space=vmem, size = 0x12000, scoped, tag = 'internal scratch']
  %s0 = inlined_call_operand.vmem [shape: f32[2,3,256], index: 0, kind: input, shape index: {}]
  %s1 = inlined_call_operand.vmem [shape: f32[32,5], index: 1, kind: input, shape index: {}]
  %s2 = inlined_call_operand.hbm [shape: f32[2,32,256], index: 2, kind: output, shape index: {}]
  %s3 = sld [smem:[#allocation0]]
  $region18: #{tpu_custom_call.1} parent=0
    _
  %s5 = ssub.s32 1, %s3
  %s6 = scalar_select 0, %s5, %s3
  $region1: #{tpu_custom_call.1} parent=0
    #allocation2 [shape = 'u8[65536]{0}', space=vmem, size = 0x10000, scoped, tag = 'output window, operand 0, single buffered']
    #allocation3 [shape = 's32[1]{0}', space=sflag, size = 0x4, scoped, tag = 'scoped memory for tpu_custom_call.1']
    %7 = vsyncpa [#allocation3], 0
    // Predicated region
    $region2: #{tpu_custom_call.1} parent=1 // pred_check
      _
    $region3: #{tpu_custom_call.1} parent=1 // pred_check_branch
      %9 = sbr.rel (0) target = $region5
    $region4: #{tpu_custom_call.1} parent=1 // pred_region
      _
    $region5: #{tpu_custom_call.1} parent=1 // pred_fallthru
      _
    // Predicated region
    $region6: #{tpu_custom_call.1} parent=1 // pred_check
      _
    $region7: #{tpu_custom_call.1} parent=1 // pred_check_branch
      %11 = sbr.rel (0) target = $region9
    $region8: #{tpu_custom_call.1} parent=1 // pred_region
      _
    $region9: #{tpu_custom_call.1} parent=1 // pred_fallthru
      _
    %v12 = vld [vmem:[%s0] sm:$0x77]
    %v13 = vld [vmem:[%s0 + $0x8] sm:$0x77]
    %v14 = vld [vmem:[%s1] sm:$0xff]
    %v15 = vld [vmem:[%s1 + $0x8] sm:$0xff]
    %v16 = vld [vmem:[%s1 + $0x10] sm:$0xff]
    %v17 = vld [vmem:[%s1 + $0x18] sm:$0xff]
    %19 = vset.pattern.permute.xlu0 0
    %20 = vperm.xlu0 %19, %v14
    %v21 = vpop.permute.xlu0 %20
    %24 = vset.pattern.permute.xlu0 0
    %25 = vperm.xlu0 %24, %v15
    %v26 = vpop.permute.xlu0 %25
    %29 = vset.pattern.permute.xlu0 0
    %30 = vperm.xlu0 %29, %v16
    %v31 = vpop.permute.xlu0 %30
    %34 = vset.pattern.permute.xlu0 0
    %35 = vperm.xlu0 %34, %v17
    %v36 = vpop.permute.xlu0 %35
    %v39 = vlaneseq
    %v40 = vshrl.u32 %v39, 7
    %v41 = vsub.s32 0, %v40
    %v42 = vrot.slane %v12, %v41
    %v43 = vlaneseq
    %v44 = vshrl.u32 %v43, 7
    %v45 = vsub.s32 4, %v44
    %v46 = vrot.slane %v12, %v45
    %v49 = vlaneseq
    %v50 = vshrl.u32 %v49, 7
    %v51 = vsub.s32 0, %v50
    %v52 = vrot.slane %v42, %v51
    %v53 = vlaneseq
    %v54 = vshrl.u32 %v53, 7
    %v55 = vsub.s32 0, %v54
    %v56 = vrot.slane %v46, %v55
    %v57 = vmul.f32 %v21, %v52
    %v58 = vmul.f32 %v21, %v56
    %v59 = vmul.f32 %v26, %v52
    %v60 = vmul.f32 %v26, %v56
    %v61 = vmul.f32 %v31, %v52
    %v62 = vmul.f32 %v31, %v56
    %v63 = vmul.f32 %v36, %v52
    %v64 = vmul.f32 %v36, %v56
    %65 = vset.pattern.permute.xlu0 1
    %66 = vperm.xlu0 %65, %v14
    %v67 = vpop.permute.xlu0 %66
    %69 = vset.pattern.permute.xlu0 1
    %70 = vperm.xlu0 %69, %v15
    %v71 = vpop.permute.xlu0 %70
    %73 = vset.pattern.permute.xlu0 1
    %74 = vperm.xlu0 %73, %v16
    %v75 = vpop.permute.xlu0 %74
    %77 = vset.pattern.permute.xlu0 1
    %78 = vperm.xlu0 %77, %v17
    %v79 = vpop.permute.xlu0 %78
    %v81 = vlaneseq
    %v82 = vshrl.u32 %v81, 7
    %v83 = vsub.s32 1, %v82
    %v84 = vrot.slane %v12, %v83
    %v85 = vlaneseq
    %v86 = vshrl.u32 %v85, 7
    %v87 = vsub.s32 5, %v86
    %v88 = vrot.slane %v12, %v87
    %v91 = vlaneseq
    %v92 = vshrl.u32 %v91, 7
    %v93 = vsub.s32 1, %v92
    %v94 = vrot.slane %v84, %v93
    %v95 = vlaneseq
    %v96 = vshrl.u32 %v95, 7
    %v97 = vsub.s32 1, %v96
    %v98 = vrot.slane %v88, %v97
    %v99 = vmul.f32 %v67, %v94
    %v100 = vmul.f32 %v67, %v98
    %v101 = vmul.f32 %v71, %v94
    %v102 = vmul.f32 %v71, %v98
    %v103 = vmul.f32 %v75, %v94
    %v104 = vmul.f32 %v75, %v98
    %v105 = vmul.f32 %v79, %v94
    %v106 = vmul.f32 %v79, %v98
    %v107 = vadd.f32 %v57, %v99
    %v108 = vadd.f32 %v58, %v100
    %v109 = vadd.f32 %v59, %v101
    %v110 = vadd.f32 %v60, %v102
    %v111 = vadd.f32 %v61, %v103
    %v112 = vadd.f32 %v62, %v104
    %v113 = vadd.f32 %v63, %v105
    %v114 = vadd.f32 %v64, %v106
    %115 = vset.pattern.permute.xlu0 2
    %116 = vperm.xlu0 %115, %v14
    %v117 = vpop.permute.xlu0 %116
    %119 = vset.pattern.permute.xlu0 2
    %120 = vperm.xlu0 %119, %v15
    %v121 = vpop.permute.xlu0 %120
    %123 = vset.pattern.permute.xlu0 2
    %124 = vperm.xlu0 %123, %v16
    %v125 = vpop.permute.xlu0 %124
    %127 = vset.pattern.permute.xlu0 2
    %128 = vperm.xlu0 %127, %v17
    %v129 = vpop.permute.xlu0 %128
    %v131 = vlaneseq
    %v132 = vshrl.u32 %v131, 7
    %v133 = vsub.s32 2, %v132
    %v134 = vrot.slane %v12, %v133
    %v135 = vlaneseq
    %v136 = vshrl.u32 %v135, 7
    %v137 = vsub.s32 6, %v136
    %v138 = vrot.slane %v12, %v137
    %v141 = vlaneseq
    %v142 = vshrl.u32 %v141, 7
    %v143 = vsub.s32 2, %v142
    %v144 = vrot.slane %v134, %v143
    %v145 = vlaneseq
    %v146 = vshrl.u32 %v145, 7
    %v147 = vsub.s32 2, %v146
    %v148 = vrot.slane %v138, %v147
    %v149 = vmul.f32 %v117, %v144
    %v150 = vmul.f32 %v117, %v148
    %v151 = vmul.f32 %v121, %v144
    %v152 = vmul.f32 %v121, %v148
    %v153 = vmul.f32 %v125, %v144
    %v154 = vmul.f32 %v125, %v148
    %v155 = vmul.f32 %v129, %v144
    %v156 = vmul.f32 %v129, %v148
    %v157 = vadd.f32 %v107, %v149
    %v158 = vadd.f32 %v108, %v150
    %v159 = vadd.f32 %v109, %v151
    %v160 = vadd.f32 %v110, %v152
    %v161 = vadd.f32 %v111, %v153
    %v162 = vadd.f32 %v112, %v154
    %v163 = vadd.f32 %v113, %v155
    %v164 = vadd.f32 %v114, %v156
    %v165 = vadd.f32 %v157, %v158
    %166 = vadd.xlane.f32.xlu0 %v165
    %v167 = vpop.xlane.xlu0 %166
    %v168 = vadd.f32 %v159, %v160
    %169 = vadd.xlane.f32.xlu0 %v168
    %v170 = vpop.xlane.xlu0 %169
    %v171 = vadd.f32 %v161, %v162
    %172 = vadd.xlane.f32.xlu0 %v171
    %v173 = vpop.xlane.xlu0 %172
    %v174 = vadd.f32 %v163, %v164
    %175 = vadd.xlane.f32.xlu0 %v174
    %v176 = vpop.xlane.xlu0 %175
    %v177 = vadd.f32 %v167, 0.0
    %v178 = vadd.f32 %v170, 0.0
    %v179 = vadd.f32 %v173, 0.0
    %v180 = vadd.f32 %v176, 0.0
    %v182 = vlaneseq
    %v183 = vshrl.u32 %v182, 7
    %v184 = vsub.s32 0, %v183
    %v185 = vrot.slane %v13, %v184
    %v186 = vlaneseq
    %v187 = vshrl.u32 %v186, 7
    %v188 = vsub.s32 4, %v187
    %v189 = vrot.slane %v13, %v188
    %v192 = vlaneseq
    %v193 = vshrl.u32 %v192, 7
    %v194 = vsub.s32 0, %v193
    %v195 = vrot.slane %v185, %v194
    %v196 = vlaneseq
    %v197 = vshrl.u32 %v196, 7
    %v198 = vsub.s32 0, %v197
    %v199 = vrot.slane %v189, %v198
    %v200 = vmul.f32 %v21, %v195
    %v201 = vmul.f32 %v21, %v199
    %v202 = vmul.f32 %v26, %v195
    %v203 = vmul.f32 %v26, %v199
    %v204 = vmul.f32 %v31, %v195
    %v205 = vmul.f32 %v31, %v199
    %v206 = vmul.f32 %v36, %v195
    %v207 = vmul.f32 %v36, %v199
    %v208 = vlaneseq
    %v209 = vshrl.u32 %v208, 7
    %v210 = vsub.s32 1, %v209
    %v211 = vrot.slane %v13, %v210
    %v212 = vlaneseq
    %v213 = vshrl.u32 %v212, 7
    %v214 = vsub.s32 5, %v213
    %v215 = vrot.slane %v13, %v214
    %v218 = vlaneseq
    %v219 = vshrl.u32 %v218, 7
    %v220 = vsub.s32 1, %v219
    %v221 = vrot.slane %v211, %v220
    %v222 = vlaneseq
    %v223 = vshrl.u32 %v222, 7
    %v224 = vsub.s32 1, %v223
    %v225 = vrot.slane %v215, %v224
    %v226 = vmul.f32 %v67, %v221
    %v227 = vmul.f32 %v67, %v225
    %v228 = vmul.f32 %v71, %v221
    %v229 = vmul.f32 %v71, %v225
    %v230 = vmul.f32 %v75, %v221
    %v231 = vmul.f32 %v75, %v225
    %v232 = vmul.f32 %v79, %v221
    %v233 = vmul.f32 %v79, %v225
    %v234 = vadd.f32 %v200, %v226
    %v235 = vadd.f32 %v201, %v227
    %v236 = vadd.f32 %v202, %v228
    %v237 = vadd.f32 %v203, %v229
    %v238 = vadd.f32 %v204, %v230
    %v239 = vadd.f32 %v205, %v231
    %v240 = vadd.f32 %v206, %v232
    %v241 = vadd.f32 %v207, %v233
    %v242 = vlaneseq
    %v243 = vshrl.u32 %v242, 7
    %v244 = vsub.s32 2, %v243
    %v245 = vrot.slane %v13, %v244
    %v246 = vlaneseq
    %v247 = vshrl.u32 %v246, 7
    %v248 = vsub.s32 6, %v247
    %v249 = vrot.slane %v13, %v248
    %v252 = vlaneseq
    %v253 = vshrl.u32 %v252, 7
    %v254 = vsub.s32 2, %v253
    %v255 = vrot.slane %v245, %v254
    %v256 = vlaneseq
    %v257 = vshrl.u32 %v256, 7
    %v258 = vsub.s32 2, %v257
    %v259 = vrot.slane %v249, %v258
    %v260 = vmul.f32 %v117, %v255
    %v261 = vmul.f32 %v117, %v259
    %v262 = vmul.f32 %v121, %v255
    %v263 = vmul.f32 %v121, %v259
    %v264 = vmul.f32 %v125, %v255
    %v265 = vmul.f32 %v125, %v259
    %v266 = vmul.f32 %v129, %v255
    %v267 = vmul.f32 %v129, %v259
    %v268 = vadd.f32 %v234, %v260
    %v269 = vadd.f32 %v235, %v261
    %v270 = vadd.f32 %v236, %v262
    %v271 = vadd.f32 %v237, %v263
    %v272 = vadd.f32 %v238, %v264
    %v273 = vadd.f32 %v239, %v265
    %v274 = vadd.f32 %v240, %v266
    %v275 = vadd.f32 %v241, %v267
    %v276 = vadd.f32 %v268, %v269
    %277 = vadd.xlane.f32.xlu0 %v276
    %v278 = vpop.xlane.xlu0 %277
    %v279 = vadd.f32 %v270, %v271
    %280 = vadd.xlane.f32.xlu0 %v279
    %v281 = vpop.xlane.xlu0 %280
    %v282 = vadd.f32 %v272, %v273
    %283 = vadd.xlane.f32.xlu0 %v282
    %v284 = vpop.xlane.xlu0 %283
    %v285 = vadd.f32 %v274, %v275
    %286 = vadd.xlane.f32.xlu0 %v285
    %v287 = vpop.xlane.xlu0 %286
    %v288 = vadd.f32 %v177, %v278
    %v289 = vadd.f32 %v178, %v281
    %v290 = vadd.f32 %v179, %v284
    %v291 = vadd.f32 %v180, %v287
    %v292 = vmul.f32 %v288, 0.001953125
    %v293 = vmul.f32 %v289, 0.001953125
    %v294 = vmul.f32 %v290, 0.001953125
    %v295 = vmul.f32 %v291, 0.001953125
    %v296 = vsub.f32 %v157, %v292
    %v297 = vsub.f32 %v158, %v292
    %v298 = vsub.f32 %v159, %v293
    %v299 = vsub.f32 %v160, %v293
    %v300 = vsub.f32 %v161, %v294
    %v301 = vsub.f32 %v162, %v294
    %v302 = vsub.f32 %v163, %v295
    %v303 = vsub.f32 %v164, %v295
    %v304 = vmul.f32 %v296, %v296
    %v305 = vmul.f32 %v297, %v297
    %v306 = vmul.f32 %v298, %v298
    %v307 = vmul.f32 %v299, %v299
    %v308 = vmul.f32 %v300, %v300
    %v309 = vmul.f32 %v301, %v301
    %v310 = vmul.f32 %v302, %v302
    %v311 = vmul.f32 %v303, %v303
    %v312 = vadd.f32 %v304, %v305
    %313 = vadd.xlane.f32.xlu0 %v312
    %v314 = vpop.xlane.xlu0 %313
    %v315 = vadd.f32 %v306, %v307
    %316 = vadd.xlane.f32.xlu0 %v315
    %v317 = vpop.xlane.xlu0 %316
    %v318 = vadd.f32 %v308, %v309
    %319 = vadd.xlane.f32.xlu0 %v318
    %v320 = vpop.xlane.xlu0 %319
    %v321 = vadd.f32 %v310, %v311
    %322 = vadd.xlane.f32.xlu0 %v321
    %v323 = vpop.xlane.xlu0 %322
    %v324 = vadd.f32 %v314, 0.0
    %v325 = vadd.f32 %v317, 0.0
    %v326 = vadd.f32 %v320, 0.0
    %v327 = vadd.f32 %v323, 0.0
    %v328 = vsub.f32 %v268, %v292
    %v329 = vsub.f32 %v269, %v292
    %v330 = vsub.f32 %v270, %v293
    %v331 = vsub.f32 %v271, %v293
    %v332 = vsub.f32 %v272, %v294
    %v333 = vsub.f32 %v273, %v294
    %v334 = vsub.f32 %v274, %v295
    %v335 = vsub.f32 %v275, %v295
    %v336 = vmul.f32 %v328, %v328
    %v337 = vmul.f32 %v329, %v329
    %v338 = vmul.f32 %v330, %v330
    %v339 = vmul.f32 %v331, %v331
    %v340 = vmul.f32 %v332, %v332
    %v341 = vmul.f32 %v333, %v333
    %v342 = vmul.f32 %v334, %v334
    %v343 = vmul.f32 %v335, %v335
    %v344 = vadd.f32 %v336, %v337
    %345 = vadd.xlane.f32.xlu0 %v344
    %v346 = vpop.xlane.xlu0 %345
    %v347 = vadd.f32 %v338, %v339
    %348 = vadd.xlane.f32.xlu0 %v347
    %v349 = vpop.xlane.xlu0 %348
    %v350 = vadd.f32 %v340, %v341
    %351 = vadd.xlane.f32.xlu0 %v350
    %v352 = vpop.xlane.xlu0 %351
    %v353 = vadd.f32 %v342, %v343
    %354 = vadd.xlane.f32.xlu0 %v353
    %v355 = vpop.xlane.xlu0 %354
    %v356 = vadd.f32 %v324, %v346
    %v357 = vadd.f32 %v325, %v349
    %v358 = vadd.f32 %v326, %v352
    %v359 = vadd.f32 %v327, %v355
    %v360 = vmul.f32 %v356, 0.001953125
    %v361 = vmul.f32 %v357, 0.001953125
    %v362 = vmul.f32 %v358, 0.001953125
    %v363 = vmul.f32 %v359, 0.001953125
    %v364 = vadd.f32 %v360, 1e-05
    %v365 = vadd.f32 %v361, 1e-05
    %v366 = vadd.f32 %v362, 1e-05
    %v367 = vadd.f32 %v363, 1e-05
    %v368 = vrsqrt.pop %v364
    %v369 = vrsqrt.pop %v365
    %v370 = vrsqrt.pop %v366
    %v371 = vrsqrt.pop %v367
    %v372 = vmul.f32 %v14, %v368
    %v373 = vmul.f32 %v15, %v369
    %v374 = vmul.f32 %v16, %v370
    %v375 = vmul.f32 %v17, %v371
    %v376 = vmul.f32 %v292, %v372
    %v377 = vmul.f32 %v293, %v373
    %v378 = vmul.f32 %v294, %v374
    %v379 = vmul.f32 %v295, %v375
    %384 = vrot.lane.b32.xlu0 %v376, 1
    %v385 = vpop.permute.xlu0 %384
    %386 = vrot.lane.b32.xlu0 %v377, 1
    %v387 = vpop.permute.xlu0 %386
    %388 = vrot.lane.b32.xlu0 %v378, 1
    %v389 = vpop.permute.xlu0 %388
    %390 = vrot.lane.b32.xlu0 %v379, 1
    %v391 = vpop.permute.xlu0 %390
    %v396 = vsub.f32 %v14, %v385
    %v397 = vsub.f32 %v15, %v387
    %v398 = vsub.f32 %v16, %v389
    %v399 = vsub.f32 %v17, %v391
    %401 = vset.pattern.permute.xlu0 3
    %402 = vperm.xlu0 %401, %v372
    %v403 = vpop.permute.xlu0 %402
    %406 = vset.pattern.permute.xlu0 3
    %407 = vperm.xlu0 %406, %v373
    %v408 = vpop.permute.xlu0 %407
    %411 = vset.pattern.permute.xlu0 3
    %412 = vperm.xlu0 %411, %v374
    %v413 = vpop.permute.xlu0 %412
    %416 = vset.pattern.permute.xlu0 3
    %417 = vperm.xlu0 %416, %v375
    %v418 = vpop.permute.xlu0 %417
    %v420 = vmul.f32 %v157, %v403
    %v421 = vmul.f32 %v158, %v403
    %v422 = vmul.f32 %v159, %v408
    %v423 = vmul.f32 %v160, %v408
    %v424 = vmul.f32 %v161, %v413
    %v425 = vmul.f32 %v162, %v413
    %v426 = vmul.f32 %v163, %v418
    %v427 = vmul.f32 %v164, %v418
    %429 = vset.pattern.permute.xlu0 4
    %430 = vperm.xlu0 %429, %v396
    %v431 = vpop.permute.xlu0 %430
    %434 = vset.pattern.permute.xlu0 4
    %435 = vperm.xlu0 %434, %v397
    %v436 = vpop.permute.xlu0 %435
    %439 = vset.pattern.permute.xlu0 4
    %440 = vperm.xlu0 %439, %v398
    %v441 = vpop.permute.xlu0 %440
    %444 = vset.pattern.permute.xlu0 4
    %445 = vperm.xlu0 %444, %v399
    %v446 = vpop.permute.xlu0 %445
    %v448 = vadd.f32 %v420, %v431
    %v449 = vadd.f32 %v421, %v431
    %v450 = vadd.f32 %v422, %v436
    %v451 = vadd.f32 %v423, %v436
    %v452 = vadd.f32 %v424, %v441
    %v453 = vadd.f32 %v425, %v441
    %v454 = vadd.f32 %v426, %v446
    %v455 = vadd.f32 %v427, %v446
    %v456 = vmul.f32 %v448, 0.01
    %v457 = vmul.f32 %v449, 0.01
    %v458 = vmul.f32 %v450, 0.01
    %v459 = vmul.f32 %v451, 0.01
    %v460 = vmul.f32 %v452, 0.01
    %v461 = vmul.f32 %v453, 0.01
    %v462 = vmul.f32 %v454, 0.01
    %v463 = vmul.f32 %v455, 0.01
    %v464 = vmax.f32 %v448, %v456
    %v465 = vmax.f32 %v449, %v457
    %v466 = vmax.f32 %v450, %v458
    %v467 = vmax.f32 %v451, %v459
    %v468 = vmax.f32 %v452, %v460
    %v469 = vmax.f32 %v453, %v461
    %v470 = vmax.f32 %v454, %v462
    %v471 = vmax.f32 %v455, %v463
    %472 = vst [vmem:[#allocation2] sm:$0xff] %v464
    %473 = vst [vmem:[#allocation2 + $0x8] sm:$0xff] %v465
    %474 = vst [vmem:[#allocation2 + $0x10] sm:$0xff] %v466
    %475 = vst [vmem:[#allocation2 + $0x18] sm:$0xff] %v467
    %476 = vst [vmem:[#allocation2 + $0x20] sm:$0xff] %v468
    %477 = vst [vmem:[#allocation2 + $0x28] sm:$0xff] %v469
    %478 = vst [vmem:[#allocation2 + $0x30] sm:$0xff] %v470
    %479 = vst [vmem:[#allocation2 + $0x38] sm:$0xff] %v471
    %v480 = vmul.f32 %v268, %v403
    %v481 = vmul.f32 %v269, %v403
    %v482 = vmul.f32 %v270, %v408
    %v483 = vmul.f32 %v271, %v408
    %v484 = vmul.f32 %v272, %v413
    %v485 = vmul.f32 %v273, %v413
    %v486 = vmul.f32 %v274, %v418
    %v487 = vmul.f32 %v275, %v418
    %v488 = vadd.f32 %v480, %v431
    %v489 = vadd.f32 %v481, %v431
    %v490 = vadd.f32 %v482, %v436
    %v491 = vadd.f32 %v483, %v436
    %v492 = vadd.f32 %v484, %v441
    %v493 = vadd.f32 %v485, %v441
    %v494 = vadd.f32 %v486, %v446
    %v495 = vadd.f32 %v487, %v446
    %v496 = vmul.f32 %v488, 0.01
    %v497 = vmul.f32 %v489, 0.01
    %v498 = vmul.f32 %v490, 0.01
    %v499 = vmul.f32 %v491, 0.01
    %v500 = vmul.f32 %v492, 0.01
    %v501 = vmul.f32 %v493, 0.01
    %v502 = vmul.f32 %v494, 0.01
    %v503 = vmul.f32 %v495, 0.01
    %v504 = vmax.f32 %v488, %v496
    %v505 = vmax.f32 %v489, %v497
    %v506 = vmax.f32 %v490, %v498
    %v507 = vmax.f32 %v491, %v499
    %v508 = vmax.f32 %v492, %v500
    %v509 = vmax.f32 %v493, %v501
    %v510 = vmax.f32 %v494, %v502
    %v511 = vmax.f32 %v495, %v503
    %s512 = scalar_lea.vmem [#allocation2], 64
    %513 = vst [vmem:[%s512] sm:$0xff] %v504
    %514 = vst [vmem:[%s512 + $0x8] sm:$0xff] %v505
    %515 = vst [vmem:[%s512 + $0x10] sm:$0xff] %v506
    %516 = vst [vmem:[%s512 + $0x18] sm:$0xff] %v507
    %517 = vst [vmem:[%s512 + $0x20] sm:$0xff] %v508
    %518 = vst [vmem:[%s512 + $0x28] sm:$0xff] %v509
    %519 = vst [vmem:[%s512 + $0x30] sm:$0xff] %v510
    %520 = vst [vmem:[%s512 + $0x38] sm:$0xff] %v511
    // Predicated region
    $region10: #{tpu_custom_call.1} parent=1 // pred_check
      _
    $region11: #{tpu_custom_call.1} parent=1 // pred_check_branch
      %522 = sbr.rel (0) target = $region13
    $region12: #{tpu_custom_call.1} parent=1 // pred_region
      %s524 = ssub.s32 2048, 2048
      %525 = vsyncadd [#allocation3], %s524
      %s526 = sshll.u32 [#allocation2], 4
      %s527 = int_to_ptr.vmem [resolvable:$true] %s526
      %532 = dma.vmem_to_hbm [thread:$0]  %s527, 2048, %s2, [#allocation3], 256, 256, 16
    $region13: #{tpu_custom_call.1} parent=1 // pred_fallthru
      _
    // Predicated region
    $region14: #{tpu_custom_call.1} parent=1 // pred_check
      _
    $region15: #{tpu_custom_call.1} parent=1 // pred_check_branch
      %534 = sbr.rel (0) target = $region17
    $region16: #{tpu_custom_call.1} parent=1 // pred_region
      %535 = dma.done [#allocation3], 2048
    $region17: #{tpu_custom_call.1} parent=1 // pred_fallthru
      _
    %536 = vsyncpa [#allocation3], 1

</llo_original>
